<compile_context>
chip_gen: v6e
topology: v6e:2x2x1
jax: 0.10.0
libtpu: 0.0.40
codegen_flags: <defaults>
</compile_context>

<pallas_src>
import jax
import jax.numpy as jnp
from jax.experimental import pallas as pl
from jax.experimental.pallas import tpu as pltpu

_LANE = 128
_SUBLANE = 8
# ~2 MiB per block: 2 in-bufs + 2 out-bufs stays well under the scoped-VMEM
# default on every generation (16 MiB v5e, 32 MiB v6e/v7x).
_TILE_BYTES = 2 * 1024 * 1024


def _copy_kernel(x_ref, o_ref):
    # Hot path: element-wise copy of the current VMEM tile (identity).
    o_ref[...] = x_ref[...]


def _pick_lane_width(n_pad: int) -> int:
    # n_pad is a multiple of 8*128; pick the widest convenient lane-dense width
    # so stores are unmasked vst and grid steps are few/large.
    for c in (4096, 2048, 1024, 512, 256, 128):
        if n_pad % c == 0:
            return c
    return _LANE


def straight_through(x: jax.Array) -> jax.Array:
    """Identity forward (StraightThrough) as a tiled Pallas TPU copy kernel."""
    if x.size == 0:
        return x

    orig_shape = x.shape
    n = x.size
    itemsize = jnp.dtype(x.dtype).itemsize

    # Flatten and pad up to a multiple of (8*128) so the slab is (8,128)-aligned
    # and every store is an unmasked, lane-dense vst.
    x_flat = x.reshape(-1)
    align = _SUBLANE * _LANE
    pad = (-n) % align
    if pad:
        x_flat = jnp.pad(x_flat, (0, pad))
    n_pad = n + pad

    c = _pick_lane_width(n_pad)
    rows = n_pad // c
    x2 = x_flat.reshape(rows, c)

    # Row tile sized for ~2 MiB blocks, multiple of 8 sublanes, capped at rows.
    tile_r = max(_SUBLANE, (_TILE_BYTES // (c * itemsize)) // _SUBLANE * _SUBLANE)
    tile_r = min(tile_r, rows)

    grid = (pl.cdiv(rows, tile_r),)

    out2 = pl.pallas_call(
        _copy_kernel,
        out_shape=jax.ShapeDtypeStruct((rows, c), x.dtype),
        grid=grid,
        in_specs=[pl.BlockSpec((tile_r, c), lambda i: (i, 0))],
        out_specs=pl.BlockSpec((tile_r, c), lambda i: (i, 0)),
        # Output aliases the input buffer: no extra HBM allocation and the
        # writeback lands on the same pages (cheapest legal form of "identity"
        # short of removing the kernel entirely).
        input_output_aliases={0: 0},
        cost_estimate=pl.CostEstimate(
            flops=0,
            transcendentals=0,
            bytes_accessed=2 * n_pad * itemsize,
        ),
        compiler_params=pltpu.CompilerParams(
            # Purely mem-bound copy: let v7x shard the row-grid across its
            # two TensorCores (no effect on single-TC v5e/v6e).
            dimension_semantics=("parallel",),
        ),
    )(x2)

    out_flat = out2.reshape(-1)
    if pad:
        out_flat = out_flat[:n]
    return out_flat.reshape(orig_shape)


if __name__ == "__main__":
    # StraightThrough(channel_num=1) has no parameters; forward(x) == x.
    key = jax.random.PRNGKey(0)
    x = jax.random.normal(key, (2, 4, 16, 16), dtype=jnp.float32)  # NCHW

    y = straight_through(x)
    jax.block_until_ready(y)

    assert y.shape == x.shape, f"shape mismatch: {y.shape} vs {x.shape}"
    assert y.dtype == x.dtype, f"dtype mismatch: {y.dtype} vs {x.dtype}"
    assert bool(jnp.array_equal(y, x)), "identity forward mismatch"

    print("KERNEL_OK")
</pallas_src>

<mosaic_0001>
module attributes {stable_mosaic.version = 11 : i64} {
  func.func @_copy_kernel(%arg0: i32, %arg1: memref<1x2048xf32, #tpu.memory_space<vmem>>, %arg2: memref<1x2048xf32, #tpu.memory_space<vmem>>) attributes {dimension_semantics = [#tpu.dimension_semantics<parallel>], iteration_bounds = array<i64: 1>, scalar_prefetch = 0 : i64, scratch_operands = 0 : i64, tpu.core_type = #tpu.core_type<tc>, window_params = [{transform_indices = @transform_0, window_bounds = array<i64: 1, 2048>}, {transform_indices = @transform_1, window_bounds = array<i64: 1, 2048>}]} {
    %c0 = arith.constant 0 : index
    %c0_0 = arith.constant 0 : index
    %0 = vector.load %arg1[%c0, %c0_0] : memref<1x2048xf32, #tpu.memory_space<vmem>>, vector<1x2048xf32>
    %c0_1 = arith.constant 0 : index
    %c0_2 = arith.constant 0 : index
    %1 = vector.load %arg2[%c0_1, %c0_2] : memref<1x2048xf32, #tpu.memory_space<vmem>>, vector<1x2048xf32>
    tpu.vector_store %arg2[%c0_1, %c0_2], %0 {strides = array<i32>} : memref<1x2048xf32, #tpu.memory_space<vmem>>, vector<1x2048xf32>,
    return
  }
  func.func @transform_0(%arg0: i32) -> (i32, i32) {
    %c0_i32 = arith.constant 0 : i32
    %c0_i32_0 = arith.constant 0 : i32
    return %arg0, %c0_i32 : i32, i32
  }
  func.func @transform_1(%arg0: i32) -> (i32, i32) {
    %c0_i32 = arith.constant 0 : i32
    %c0_i32_0 = arith.constant 0 : i32
    return %arg0, %c0_i32 : i32, i32
  }
}

</mosaic_0001>

<llo_original>
// kernel: tpu_custom_call.1
$region0: #{tpu_custom_call.1}
  #allocation0 [shape = 'u32[]', space=smem, size = 0x4, offset = 0x4, fixed_abs, tag = 'smem constant byte address 0x4 - core index']
  #allocation1 [shape = 'u32[144,128]{1,0:T(1,128)}', space=vmem, size = 0x12000, scoped, tag = 'internal scratch']
  %s0 = inlined_call_operand.hbm [shape: f32[1,2048], index: 0, kind: input, shape index: {}, may-alias: {0,1}]
  %s1 = inlined_call_operand.hbm [shape: f32[1,2048], index: 1, kind: output, shape index: {}, may-alias: {0,1}]
  %s2 = sld [smem:[#allocation0]]
  $region18: #{tpu_custom_call.1} parent=0
    _
  %s4 = ssub.s32 1, %s2
  %s5 = scalar_select 0, %s4, %s2
  $region1: #{tpu_custom_call.1} parent=0
    #allocation2 [shape = 'u8[8192]{0}', space=vmem, size = 0x2000, scoped, tag = 'input window, operand 0, single buffered']
    #allocation3 [shape = 's32[1]{0}', space=sflag, size = 0x4, scoped, tag = 'scoped memory for tpu_custom_call.1']
    #allocation4 [shape = 's32[1]{0}', space=sflag, size = 0x4, scoped, tag = 'scoped memory for tpu_custom_call.1']
    #allocation5 [shape = 'u8[8192]{0}', space=vmem, size = 0x2000, scoped, tag = 'output window, operand 0, single buffered']
    %6 = vsyncpa [#allocation3], 0
    %7 = vsyncpa [#allocation4], 0
    // Predicated region
    $region2: #{tpu_custom_call.1} parent=1 // pred_check
      _
    $region3: #{tpu_custom_call.1} parent=1 // pred_check_branch
      %9 = sbr.rel (0) target = $region5
    $region4: #{tpu_custom_call.1} parent=1 // pred_region
      %s11 = ssub.s32 256, 256
      %12 = vsyncadd [#allocation3], %s11
      %s14 = sshll.u32 [#allocation2], 4
      %s15 = int_to_ptr.vmem [resolvable:$true] %s14
      %17 = dma.hbm_to_vmem [thread:$0]  %s0, 256, %s15, [#allocation3]
    $region5: #{tpu_custom_call.1} parent=1 // pred_fallthru
      _
    // Predicated region
    $region6: #{tpu_custom_call.1} parent=1 // pred_check
      _
    $region7: #{tpu_custom_call.1} parent=1 // pred_check_branch
      %19 = sbr.rel (0) target = $region9
    $region8: #{tpu_custom_call.1} parent=1 // pred_region
      %20 = dma.done [#allocation3], 256
    $region9: #{tpu_custom_call.1} parent=1 // pred_fallthru
      _
    %v21 = vld [vmem:[#allocation2] sm:$0xff]
    %v22 = vld [vmem:[#allocation2 + $0x8] sm:$0xff]
    %23 = vst [vmem:[#allocation5] sm:$0xff] %v21
    %24 = vst [vmem:[#allocation5 + $0x8] sm:$0xff] %v22
    // Predicated region
    $region10: #{tpu_custom_call.1} parent=1 // pred_check
      _
    $region11: #{tpu_custom_call.1} parent=1 // pred_check_branch
      %26 = sbr.rel (0) target = $region13
    $region12: #{tpu_custom_call.1} parent=1 // pred_region
      %s28 = ssub.s32 256, 256
      %29 = vsyncadd [#allocation4], %s28
      %s31 = sshll.u32 [#allocation5], 4
      %s32 = int_to_ptr.vmem [resolvable:$true] %s31
      %34 = dma.vmem_to_hbm [thread:$0]  %s32, 256, %s1, [#allocation4]
    $region13: #{tpu_custom_call.1} parent=1 // pred_fallthru
      _
    // Predicated region
    $region14: #{tpu_custom_call.1} parent=1 // pred_check
      _
    $region15: #{tpu_custom_call.1} parent=1 // pred_check_branch
      %36 = sbr.rel (0) target = $region17
    $region16: #{tpu_custom_call.1} parent=1 // pred_region
      %37 = dma.done [#allocation4], 256
    $region17: #{tpu_custom_call.1} parent=1 // pred_fallthru
      _
    %38 = vsyncpa [#allocation3], 1
    %39 = vsyncpa [#allocation4], 1

</llo_original>
